<compile_context>
chip_gen: v6e
topology: v6e:2x2x1
jax: 0.10.0
libtpu: 0.0.40
codegen_flags: <defaults>
</compile_context>

<pallas_src>
import jax
import jax.numpy as jnp
from jax.experimental import pallas as pl
from jax.experimental.pallas import tpu as pltpu


def _spectral_mul_kernel(ar_ref, ai_ref, wr_ref, wi_ref, out_ref):
    """Complex channel contraction for one spectral corner (region).

    ar/ai : (B, Cin, M)     input Fourier modes, real / imag (M = m1*m2, lanes)
    wr/wi : (Cin, Cout, M)  per-mode weights, real / imag
    out   : (2, B, Cout, M) packed output, [0] = real, [1] = imag
    """
    ar = ar_ref[...]
    ai = ai_ref[...]
    wr = wr_ref[...]
    wi = wi_ref[...]

    b, cin, m = ar.shape
    cout = wr.shape[1]

    acc_r = jnp.zeros((b, cout, m), jnp.float32)
    acc_i = jnp.zeros((b, cout, m), jnp.float32)
    # Statically unrolled K-loop over input channels: every step is a
    # lane-aligned broadcast FMA over the (B, Cout, M) tile — no cross-lane
    # traffic, no masked partial stores, accumulators stay in vregs/VMEM.
    # (bf16 inputs with f32 accumulation are an option on v6e/v7x when the
    #  accuracy budget allows; kept f32 here to preserve the 1e-5 check.)
    for i in range(cin):
        a_r = ar[:, i, :][:, None, :]        # (B, 1, M)
        a_i = ai[:, i, :][:, None, :]
        w_r = wr[i][None, :, :]              # (1, Cout, M)
        w_i = wi[i][None, :, :]
        acc_r = acc_r + (a_r * w_r - a_i * w_i)
        acc_i = acc_i + (a_r * w_i + a_i * w_r)

    out_ref[0] = acc_r
    out_ref[1] = acc_i


def _spectral_mul(ar, ai, wr, wi):
    """Pallas complex contraction over input channels.

    ar/ai : (R, B, Cin, M)    float32
    wr/wi : (R, Cin, Cout, M) float32
    returns (R, 2, B, Cout, M) float32  (dim 1: [real, imag])
    """
    R, B, Cin, M = ar.shape
    Cout = wr.shape[2]

    a_spec = pl.BlockSpec((None, B, Cin, M), lambda r: (r, 0, 0, 0))
    w_spec = pl.BlockSpec((None, Cin, Cout, M), lambda r: (r, 0, 0, 0))
    o_spec = pl.BlockSpec((None, 2, B, Cout, M), lambda r: (r, 0, 0, 0, 0))

    return pl.pallas_call(
        _spectral_mul_kernel,
        grid=(R,),
        in_specs=[a_spec, a_spec, w_spec, w_spec],
        out_specs=o_spec,
        out_shape=jax.ShapeDtypeStruct((R, 2, B, Cout, M), jnp.float32),
        # NOTE: at production FNO sizes (Cin=Cout=64, modes>=32) add a Cout or
        # modes2 grid axis and set vmem_limit_bytes explicitly so the resident
        # blocks fit v7x's 64 MiB VMEM; at these sizes the defaults suffice.
        compiler_params=pltpu.CompilerParams(
            dimension_semantics=("parallel",)),
    )(ar, ai, wr, wi)


def spectral_conv2d(x, weights1, weights2, modes1, modes2):
    """Forward pass of SpectralConv2d.

    x        : (B, Cin, H, W) float32
    weights1 : (Cin, Cout, modes1, modes2) complex64
    weights2 : (Cin, Cout, modes1, modes2) complex64
    returns  : (B, Cout, H, W) float32
    """
    B, Cin, H, W = x.shape
    Cout = weights1.shape[1]
    Wh = W // 2 + 1
    M = modes1 * modes2

    # TODO(synk): rfft2 / irfft2 have no Pallas TPU primitive; they run in XLA.
    x_ft = jnp.fft.rfft2(x)                                   # (B,Cin,H,Wh) c64

    # Slice the two retained spectral corners *before* splitting real/imag so
    # the extra wrapper copies are O(B*Cin*M), not O(B*Cin*H*Wh).  If
    # 2*modes1 > H the corners overlap and the second scatter below wins —
    # identical behavior to the PyTorch reference.
    a = jnp.stack([x_ft[:, :, :modes1, :modes2],
                   x_ft[:, :, H - modes1:, :modes2]], axis=0)  # (2,B,Cin,m1,m2)
    a = a.reshape(2, B, Cin, M)          # modes flattened onto the lane axis
    w = jnp.stack([weights1, weights2], axis=0).reshape(2, Cin, Cout, M)

    ar = jnp.real(a).astype(jnp.float32)
    ai = jnp.imag(a).astype(jnp.float32)
    wr = jnp.real(w).astype(jnp.float32)
    wi = jnp.imag(w).astype(jnp.float32)

    out = _spectral_mul(ar, ai, wr, wi)             # (2, 2, B, Cout, M) f32
    out_c = jax.lax.complex(out[:, 0], out[:, 1])   # (2, B, Cout, M) c64
    out_c = out_c.reshape(2, B, Cout, modes1, modes2)

    out_ft = jnp.zeros((B, Cout, H, Wh), dtype=jnp.complex64)
    out_ft = out_ft.at[:, :, :modes1, :modes2].set(out_c[0])
    out_ft = out_ft.at[:, :, H - modes1:, :modes2].set(out_c[1])
    return jnp.fft.irfft2(out_ft, s=(H, W))          # (B, Cout, H, W) f32


def _reference(x, weights1, weights2, modes1, modes2):
    """Pure-JAX reference mirroring the PyTorch forward exactly."""
    B, Cin, H, W = x.shape
    Cout = weights1.shape[1]
    Wh = W // 2 + 1
    x_ft = jnp.fft.rfft2(x)
    out_ft = jnp.zeros((B, Cout, H, Wh), dtype=jnp.complex64)
    out_ft = out_ft.at[:, :, :modes1, :modes2].set(
        jnp.einsum('bixy,ioxy->boxy', x_ft[:, :, :modes1, :modes2], weights1))
    out_ft = out_ft.at[:, :, H - modes1:, :modes2].set(
        jnp.einsum('bixy,ioxy->boxy', x_ft[:, :, H - modes1:, :modes2],
                   weights2))
    return jnp.fft.irfft2(out_ft, s=(H, W))


if __name__ == "__main__":
    # Module config (small, consistent with SpectralConv2d.__init__)
    in_channels, out_channels = 4, 4
    modes1, modes2 = 4, 4
    B, H, W = 2, 16, 16

    key = jax.random.PRNGKey(0)
    k_x, k_w1r, k_w1i, k_w2r, k_w2i = jax.random.split(key, 5)

    scale = 1.0 / (in_channels * out_channels)
    wshape = (in_channels, out_channels, modes1, modes2)
    # torch.rand(..., dtype=cfloat) -> uniform[0,1) real and imag parts.
    weights1 = scale * (jax.random.uniform(k_w1r, wshape, jnp.float32)
                        + 1j * jax.random.uniform(k_w1i, wshape, jnp.float32))
    weights2 = scale * (jax.random.uniform(k_w2r, wshape, jnp.float32)
                        + 1j * jax.random.uniform(k_w2i, wshape, jnp.float32))
    weights1 = weights1.astype(jnp.complex64)
    weights2 = weights2.astype(jnp.complex64)

    x = jax.random.normal(k_x, (B, in_channels, H, W), jnp.float32)

    fwd = jax.jit(spectral_conv2d, static_argnums=(3, 4))
    out = jax.block_until_ready(fwd(x, weights1, weights2, modes1, modes2))

    ref = _reference(x, weights1, weights2, modes1, modes2)
    assert out.shape == (B, out_channels, H, W)
    assert jnp.allclose(out, ref, atol=1e-5, rtol=1e-5), (
        float(jnp.max(jnp.abs(out - ref))))

    print("KERNEL_OK")
</pallas_src>

<mosaic_0001>
module attributes {stable_mosaic.version = 11 : i64} {
  func.func @_spectral_mul_kernel(%arg0: i32, %arg1: memref<1x2x4x16xf32, #tpu.memory_space<vmem>>, %arg2: memref<1x2x4x16xf32, #tpu.memory_space<vmem>>, %arg3: memref<1x4x4x16xf32, #tpu.memory_space<vmem>>, %arg4: memref<1x4x4x16xf32, #tpu.memory_space<vmem>>, %arg5: memref<1x2x2x4x16xf32, #tpu.memory_space<vmem>>) attributes {dimension_semantics = [#tpu.dimension_semantics<parallel>], iteration_bounds = array<i64: 2>, scalar_prefetch = 0 : i64, scratch_operands = 0 : i64, tpu.core_type = #tpu.core_type<tc>, window_params = [{transform_indices = @transform_0, window_bounds = array<i64: 1, 2, 4, 16>}, {transform_indices = @transform_1, window_bounds = array<i64: 1, 2, 4, 16>}, {transform_indices = @transform_2, window_bounds = array<i64: 1, 4, 4, 16>}, {transform_indices = @transform_3, window_bounds = array<i64: 1, 4, 4, 16>}, {transform_indices = @transform_4, window_bounds = array<i64: 1, 2, 2, 4, 16>}]} {
    %c0 = arith.constant 0 : index
    %c0_0 = arith.constant 0 : index
    %c0_1 = arith.constant 0 : index
    %c0_2 = arith.constant 0 : index
    %0 = vector.load %arg1[%c0, %c0_0, %c0_1, %c0_2] : memref<1x2x4x16xf32, #tpu.memory_space<vmem>>, vector<1x2x4x16xf32>
    %1 = vector.shape_cast %0 : vector<1x2x4x16xf32> to vector<2x4x16xf32>
    %c0_3 = arith.constant 0 : index
    %c0_4 = arith.constant 0 : index
    %c0_5 = arith.constant 0 : index
    %c0_6 = arith.constant 0 : index
    %2 = vector.load %arg2[%c0_3, %c0_4, %c0_5, %c0_6] : memref<1x2x4x16xf32, #tpu.memory_space<vmem>>, vector<1x2x4x16xf32>
    %3 = vector.shape_cast %2 : vector<1x2x4x16xf32> to vector<2x4x16xf32>
    %c0_7 = arith.constant 0 : index
    %c0_8 = arith.constant 0 : index
    %c0_9 = arith.constant 0 : index
    %c0_10 = arith.constant 0 : index
    %4 = vector.load %arg3[%c0_7, %c0_8, %c0_9, %c0_10] : memref<1x4x4x16xf32, #tpu.memory_space<vmem>>, vector<1x4x4x16xf32>
    %5 = vector.shape_cast %4 : vector<1x4x4x16xf32> to vector<4x4x16xf32>
    %c0_11 = arith.constant 0 : index
    %c0_12 = arith.constant 0 : index
    %c0_13 = arith.constant 0 : index
    %c0_14 = arith.constant 0 : index
    %6 = vector.load %arg4[%c0_11, %c0_12, %c0_13, %c0_14] : memref<1x4x4x16xf32, #tpu.memory_space<vmem>>, vector<1x4x4x16xf32>
    %7 = vector.shape_cast %6 : vector<1x4x4x16xf32> to vector<4x4x16xf32>
    %cst = arith.constant 0.000000e+00 : f32
    %8 = vector.broadcast %cst : f32 to vector<2x4x16xf32>
    %cst_15 = arith.constant 0.000000e+00 : f32
    %9 = vector.broadcast %cst_15 : f32 to vector<2x4x16xf32>
    %10 = vector.extract_strided_slice %1 {offsets = [0, 0, 0], sizes = [2, 1, 16], strides = [1, 1, 1]} : vector<2x4x16xf32> to vector<2x1x16xf32>
    %11 = vector.shape_cast %10 : vector<2x1x16xf32> to vector<2x16xf32>
    %12 = vector.shape_cast %11 : vector<2x16xf32> to vector<2x1x16xf32>
    %13 = vector.extract_strided_slice %3 {offsets = [0, 0, 0], sizes = [2, 1, 16], strides = [1, 1, 1]} : vector<2x4x16xf32> to vector<2x1x16xf32>
    %14 = vector.shape_cast %13 : vector<2x1x16xf32> to vector<2x16xf32>
    %15 = vector.shape_cast %14 : vector<2x16xf32> to vector<2x1x16xf32>
    %16 = vector.extract_strided_slice %5 {offsets = [0, 0, 0], sizes = [1, 4, 16], strides = [1, 1, 1]} : vector<4x4x16xf32> to vector<1x4x16xf32>
    %17 = vector.shape_cast %16 : vector<1x4x16xf32> to vector<4x16xf32>
    %18 = vector.shape_cast %17 : vector<4x16xf32> to vector<1x4x16xf32>
    %19 = vector.extract_strided_slice %7 {offsets = [0, 0, 0], sizes = [1, 4, 16], strides = [1, 1, 1]} : vector<4x4x16xf32> to vector<1x4x16xf32>
    %20 = vector.shape_cast %19 : vector<1x4x16xf32> to vector<4x16xf32>
    %21 = vector.shape_cast %20 : vector<4x16xf32> to vector<1x4x16xf32>
    %22 = vector.broadcast %12 : vector<2x1x16xf32> to vector<2x4x16xf32>
    %23 = vector.broadcast %18 : vector<1x4x16xf32> to vector<2x4x16xf32>
    %24 = arith.mulf %22, %23 : vector<2x4x16xf32>
    %25 = vector.broadcast %15 : vector<2x1x16xf32> to vector<2x4x16xf32>
    %26 = vector.broadcast %21 : vector<1x4x16xf32> to vector<2x4x16xf32>
    %27 = arith.mulf %25, %26 : vector<2x4x16xf32>
    %28 = arith.subf %24, %27 : vector<2x4x16xf32>
    %29 = arith.addf %8, %28 : vector<2x4x16xf32>
    %30 = vector.broadcast %12 : vector<2x1x16xf32> to vector<2x4x16xf32>
    %31 = vector.broadcast %21 : vector<1x4x16xf32> to vector<2x4x16xf32>
    %32 = arith.mulf %30, %31 : vector<2x4x16xf32>
    %33 = vector.broadcast %15 : vector<2x1x16xf32> to vector<2x4x16xf32>
    %34 = vector.broadcast %18 : vector<1x4x16xf32> to vector<2x4x16xf32>
    %35 = arith.mulf %33, %34 : vector<2x4x16xf32>
    %36 = arith.addf %32, %35 : vector<2x4x16xf32>
    %37 = arith.addf %9, %36 : vector<2x4x16xf32>
    %38 = vector.extract_strided_slice %1 {offsets = [0, 1, 0], sizes = [2, 1, 16], strides = [1, 1, 1]} : vector<2x4x16xf32> to vector<2x1x16xf32>
    %39 = vector.shape_cast %38 : vector<2x1x16xf32> to vector<2x16xf32>
    %40 = vector.shape_cast %39 : vector<2x16xf32> to vector<2x1x16xf32>
    %41 = vector.extract_strided_slice %3 {offsets = [0, 1, 0], sizes = [2, 1, 16], strides = [1, 1, 1]} : vector<2x4x16xf32> to vector<2x1x16xf32>
    %42 = vector.shape_cast %41 : vector<2x1x16xf32> to vector<2x16xf32>
    %43 = vector.shape_cast %42 : vector<2x16xf32> to vector<2x1x16xf32>
    %44 = vector.extract_strided_slice %5 {offsets = [1, 0, 0], sizes = [1, 4, 16], strides = [1, 1, 1]} : vector<4x4x16xf32> to vector<1x4x16xf32>
    %45 = vector.shape_cast %44 : vector<1x4x16xf32> to vector<4x16xf32>
    %46 = vector.shape_cast %45 : vector<4x16xf32> to vector<1x4x16xf32>
    %47 = vector.extract_strided_slice %7 {offsets = [1, 0, 0], sizes = [1, 4, 16], strides = [1, 1, 1]} : vector<4x4x16xf32> to vector<1x4x16xf32>
    %48 = vector.shape_cast %47 : vector<1x4x16xf32> to vector<4x16xf32>
    %49 = vector.shape_cast %48 : vector<4x16xf32> to vector<1x4x16xf32>
    %50 = vector.broadcast %40 : vector<2x1x16xf32> to vector<2x4x16xf32>
    %51 = vector.broadcast %46 : vector<1x4x16xf32> to vector<2x4x16xf32>
    %52 = arith.mulf %50, %51 : vector<2x4x16xf32>
    %53 = vector.broadcast %43 : vector<2x1x16xf32> to vector<2x4x16xf32>
    %54 = vector.broadcast %49 : vector<1x4x16xf32> to vector<2x4x16xf32>
    %55 = arith.mulf %53, %54 : vector<2x4x16xf32>
    %56 = arith.subf %52, %55 : vector<2x4x16xf32>
    %57 = arith.addf %29, %56 : vector<2x4x16xf32>
    %58 = vector.broadcast %40 : vector<2x1x16xf32> to vector<2x4x16xf32>
    %59 = vector.broadcast %49 : vector<1x4x16xf32> to vector<2x4x16xf32>
    %60 = arith.mulf %58, %59 : vector<2x4x16xf32>
    %61 = vector.broadcast %43 : vector<2x1x16xf32> to vector<2x4x16xf32>
    %62 = vector.broadcast %46 : vector<1x4x16xf32> to vector<2x4x16xf32>
    %63 = arith.mulf %61, %62 : vector<2x4x16xf32>
    %64 = arith.addf %60, %63 : vector<2x4x16xf32>
    %65 = arith.addf %37, %64 : vector<2x4x16xf32>
    %66 = vector.extract_strided_slice %1 {offsets = [0, 2, 0], sizes = [2, 1, 16], strides = [1, 1, 1]} : vector<2x4x16xf32> to vector<2x1x16xf32>
    %67 = vector.shape_cast %66 : vector<2x1x16xf32> to vector<2x16xf32>
    %68 = vector.shape_cast %67 : vector<2x16xf32> to vector<2x1x16xf32>
    %69 = vector.extract_strided_slice %3 {offsets = [0, 2, 0], sizes = [2, 1, 16], strides = [1, 1, 1]} : vector<2x4x16xf32> to vector<2x1x16xf32>
    %70 = vector.shape_cast %69 : vector<2x1x16xf32> to vector<2x16xf32>
    %71 = vector.shape_cast %70 : vector<2x16xf32> to vector<2x1x16xf32>
    %72 = vector.extract_strided_slice %5 {offsets = [2, 0, 0], sizes = [1, 4, 16], strides = [1, 1, 1]} : vector<4x4x16xf32> to vector<1x4x16xf32>
    %73 = vector.shape_cast %72 : vector<1x4x16xf32> to vector<4x16xf32>
    %74 = vector.shape_cast %73 : vector<4x16xf32> to vector<1x4x16xf32>
    %75 = vector.extract_strided_slice %7 {offsets = [2, 0, 0], sizes = [1, 4, 16], strides = [1, 1, 1]} : vector<4x4x16xf32> to vector<1x4x16xf32>
    %76 = vector.shape_cast %75 : vector<1x4x16xf32> to vector<4x16xf32>
    %77 = vector.shape_cast %76 : vector<4x16xf32> to vector<1x4x16xf32>
    %78 = vector.broadcast %68 : vector<2x1x16xf32> to vector<2x4x16xf32>
    %79 = vector.broadcast %74 : vector<1x4x16xf32> to vector<2x4x16xf32>
    %80 = arith.mulf %78, %79 : vector<2x4x16xf32>
    %81 = vector.broadcast %71 : vector<2x1x16xf32> to vector<2x4x16xf32>
    %82 = vector.broadcast %77 : vector<1x4x16xf32> to vector<2x4x16xf32>
    %83 = arith.mulf %81, %82 : vector<2x4x16xf32>
    %84 = arith.subf %80, %83 : vector<2x4x16xf32>
    %85 = arith.addf %57, %84 : vector<2x4x16xf32>
    %86 = vector.broadcast %68 : vector<2x1x16xf32> to vector<2x4x16xf32>
    %87 = vector.broadcast %77 : vector<1x4x16xf32> to vector<2x4x16xf32>
    %88 = arith.mulf %86, %87 : vector<2x4x16xf32>
    %89 = vector.broadcast %71 : vector<2x1x16xf32> to vector<2x4x16xf32>
    %90 = vector.broadcast %74 : vector<1x4x16xf32> to vector<2x4x16xf32>
    %91 = arith.mulf %89, %90 : vector<2x4x16xf32>
    %92 = arith.addf %88, %91 : vector<2x4x16xf32>
    %93 = arith.addf %65, %92 : vector<2x4x16xf32>
    %94 = vector.extract_strided_slice %1 {offsets = [0, 3, 0], sizes = [2, 1, 16], strides = [1, 1, 1]} : vector<2x4x16xf32> to vector<2x1x16xf32>
    %95 = vector.shape_cast %94 : vector<2x1x16xf32> to vector<2x16xf32>
    %96 = vector.shape_cast %95 : vector<2x16xf32> to vector<2x1x16xf32>
    %97 = vector.extract_strided_slice %3 {offsets = [0, 3, 0], sizes = [2, 1, 16], strides = [1, 1, 1]} : vector<2x4x16xf32> to vector<2x1x16xf32>
    %98 = vector.shape_cast %97 : vector<2x1x16xf32> to vector<2x16xf32>
    %99 = vector.shape_cast %98 : vector<2x16xf32> to vector<2x1x16xf32>
    %100 = vector.extract_strided_slice %5 {offsets = [3, 0, 0], sizes = [1, 4, 16], strides = [1, 1, 1]} : vector<4x4x16xf32> to vector<1x4x16xf32>
    %101 = vector.shape_cast %100 : vector<1x4x16xf32> to vector<4x16xf32>
    %102 = vector.shape_cast %101 : vector<4x16xf32> to vector<1x4x16xf32>
    %103 = vector.extract_strided_slice %7 {offsets = [3, 0, 0], sizes = [1, 4, 16], strides = [1, 1, 1]} : vector<4x4x16xf32> to vector<1x4x16xf32>
    %104 = vector.shape_cast %103 : vector<1x4x16xf32> to vector<4x16xf32>
    %105 = vector.shape_cast %104 : vector<4x16xf32> to vector<1x4x16xf32>
    %106 = vector.broadcast %96 : vector<2x1x16xf32> to vector<2x4x16xf32>
    %107 = vector.broadcast %102 : vector<1x4x16xf32> to vector<2x4x16xf32>
    %108 = arith.mulf %106, %107 : vector<2x4x16xf32>
    %109 = vector.broadcast %99 : vector<2x1x16xf32> to vector<2x4x16xf32>
    %110 = vector.broadcast %105 : vector<1x4x16xf32> to vector<2x4x16xf32>
    %111 = arith.mulf %109, %110 : vector<2x4x16xf32>
    %112 = arith.subf %108, %111 : vector<2x4x16xf32>
    %113 = arith.addf %85, %112 : vector<2x4x16xf32>
    %114 = vector.broadcast %96 : vector<2x1x16xf32> to vector<2x4x16xf32>
    %115 = vector.broadcast %105 : vector<1x4x16xf32> to vector<2x4x16xf32>
    %116 = arith.mulf %114, %115 : vector<2x4x16xf32>
    %117 = vector.broadcast %99 : vector<2x1x16xf32> to vector<2x4x16xf32>
    %118 = vector.broadcast %102 : vector<1x4x16xf32> to vector<2x4x16xf32>
    %119 = arith.mulf %117, %118 : vector<2x4x16xf32>
    %120 = arith.addf %116, %119 : vector<2x4x16xf32>
    %121 = arith.addf %93, %120 : vector<2x4x16xf32>
    %c0_16 = arith.constant 0 : index
    %c0_17 = arith.constant 0 : index
    %c0_18 = arith.constant 0 : index
    %c0_19 = arith.constant 0 : index
    %c0_20 = arith.constant 0 : index
    %122 = vector.load %arg5[%c0_16, %c0_17, %c0_18, %c0_19, %c0_20] : memref<1x2x2x4x16xf32, #tpu.memory_space<vmem>>, vector<1x1x2x4x16xf32>
    %123 = vector.shape_cast %122 : vector<1x1x2x4x16xf32> to vector<2x4x16xf32>
    %124 = vector.shape_cast %113 : vector<2x4x16xf32> to vector<1x1x2x4x16xf32>
    tpu.vector_store %arg5[%c0_16, %c0_17, %c0_18, %c0_19, %c0_20], %124 {strides = array<i32>} : memref<1x2x2x4x16xf32, #tpu.memory_space<vmem>>, vector<1x1x2x4x16xf32>,
    %c0_21 = arith.constant 0 : index
    %c1 = arith.constant 1 : index
    %c0_22 = arith.constant 0 : index
    %c0_23 = arith.constant 0 : index
    %c0_24 = arith.constant 0 : index
    %125 = vector.load %arg5[%c0_21, %c1, %c0_22, %c0_23, %c0_24] : memref<1x2x2x4x16xf32, #tpu.memory_space<vmem>>, vector<1x1x2x4x16xf32>
    %126 = vector.shape_cast %125 : vector<1x1x2x4x16xf32> to vector<2x4x16xf32>
    %127 = vector.shape_cast %121 : vector<2x4x16xf32> to vector<1x1x2x4x16xf32>
    tpu.vector_store %arg5[%c0_21, %c1, %c0_22, %c0_23, %c0_24], %127 {strides = array<i32>} : memref<1x2x2x4x16xf32, #tpu.memory_space<vmem>>, vector<1x1x2x4x16xf32>,
    return
  }
  func.func @transform_0(%arg0: i32) -> (i32, i32, i32, i32) {
    %c0_i32 = arith.constant 0 : i32
    %c0_i32_0 = arith.constant 0 : i32
    %c0_i32_1 = arith.constant 0 : i32
    %c0_i32_2 = arith.constant 0 : i32
    return %arg0, %c0_i32, %c0_i32_0, %c0_i32_1 : i32, i32, i32, i32
  }
  func.func @transform_1(%arg0: i32) -> (i32, i32, i32, i32) {
    %c0_i32 = arith.constant 0 : i32
    %c0_i32_0 = arith.constant 0 : i32
    %c0_i32_1 = arith.constant 0 : i32
    %c0_i32_2 = arith.constant 0 : i32
    return %arg0, %c0_i32, %c0_i32_0, %c0_i32_1 : i32, i32, i32, i32
  }
  func.func @transform_2(%arg0: i32) -> (i32, i32, i32, i32) {
    %c0_i32 = arith.constant 0 : i32
    %c0_i32_0 = arith.constant 0 : i32
    %c0_i32_1 = arith.constant 0 : i32
    %c0_i32_2 = arith.constant 0 : i32
    return %arg0, %c0_i32, %c0_i32_0, %c0_i32_1 : i32, i32, i32, i32
  }
  func.func @transform_3(%arg0: i32) -> (i32, i32, i32, i32) {
    %c0_i32 = arith.constant 0 : i32
    %c0_i32_0 = arith.constant 0 : i32
    %c0_i32_1 = arith.constant 0 : i32
    %c0_i32_2 = arith.constant 0 : i32
    return %arg0, %c0_i32, %c0_i32_0, %c0_i32_1 : i32, i32, i32, i32
  }
  func.func @transform_4(%arg0: i32) -> (i32, i32, i32, i32, i32) {
    %c0_i32 = arith.constant 0 : i32
    %c0_i32_0 = arith.constant 0 : i32
    %c0_i32_1 = arith.constant 0 : i32
    %c0_i32_2 = arith.constant 0 : i32
    %c0_i32_3 = arith.constant 0 : i32
    return %arg0, %c0_i32, %c0_i32_0, %c0_i32_1, %c0_i32_2 : i32, i32, i32, i32, i32
  }
}

</mosaic_0001>

<llo_original>
// kernel: custom-call
$region0: #{custom-call}
  %s0 = inlined_call_operand.hbm [shape: c64[4,4,4,4], index: 0, kind: input, shape index: {}]
  %s1 = inlined_call_operand.vmem [shape: f32[4,4,4,4], index: 1, kind: output, shape index: {}]
  $region1: #{custom-call} parent=0
    #allocation0 [shape = 's32[1]{0}', space=sflag, size = 0x4, scoped, tag = 'scoped memory for custom-call']
    %2 = vsyncpa [#allocation0], 0
    %s3 = sshll.u32 %s1, 4
    %s4 = int_to_ptr.vmem [resolvable:$true] %s3
    %6 = dma.hbm_to_vmem [thread:$0]  %s0, 1024, %s4, [#allocation0]
    %7 = dma.done [#allocation0], 1024
    %8 = vsyncpa [#allocation0], 1

// kernel: custom-call.1
$region0: #{custom-call.1}
  %s0 = inlined_call_operand.hbm [shape: c64[4,4,4,4], index: 0, kind: input, shape index: {}]
  %s1 = inlined_call_operand.vmem [shape: f32[4,4,4,4], index: 1, kind: output, shape index: {}]
  %s2 = scalar_lea.hbm %s0, 1024
  $region1: #{custom-call.1} parent=0
    #allocation0 [shape = 's32[1]{0}', space=sflag, size = 0x4, scoped, tag = 'scoped memory for custom-call.1']
    %3 = vsyncpa [#allocation0], 0
    %s4 = sshll.u32 %s1, 4
    %s5 = int_to_ptr.vmem [resolvable:$true] %s4
    %7 = dma.hbm_to_vmem [thread:$0]  %s2, 1024, %s5, [#allocation0]
    %8 = dma.done [#allocation0], 1024
    %9 = vsyncpa [#allocation0], 1

// kernel: spectral_conv2d.1
$region0: #{spectral_conv2d.1}
  #allocation0 [shape = 'u32[]', space=smem, size = 0x4, offset = 0x4, fixed_abs, tag = 'smem constant byte address 0x4 - core index']
  #allocation1 [shape = 'u32[144,128]{1,0:T(1,128)}', space=vmem, size = 0x12000, scoped, tag = 'internal scratch']
  %s0 = inlined_call_operand.vmem [shape: f32[2,2,4,16], index: 0, kind: input, shape index: {}]
  %s1 = inlined_call_operand.vmem [shape: f32[2,2,4,16], index: 1, kind: input, shape index: {}]
  %s2 = inlined_call_operand.vmem [shape: f32[2,4,4,16], index: 2, kind: input, shape index: {}]
  %s3 = inlined_call_operand.vmem [shape: f32[2,4,4,16], index: 3, kind: input, shape index: {}]
  %s4 = inlined_call_operand.vmem [shape: f32[2,2,2,4,16], index: 4, kind: output, shape index: {}]
  %s5 = sld [smem:[#allocation0]]
  $region49: #{spectral_conv2d.1} parent=0
    _
  %s7 = ssub.s32 1, %s5
  %s8 = scalar_select 0, %s7, %s5
  loop: start=0, step=1, limit=4
  $region2: #{spectral_conv2d.1} parent=0 // loop_pre_header
    _
  $region3: #{spectral_conv2d.1} parent=0 // loop_header
    %s10 = sphi 0, %s14
    %p11 = scmp.ge.s32.totalorder %s10, 4
    %s20 = sphi 0, %s22
    %s23 = sphi 0, %s20
    %s24 = sphi 0, %s23
    %s40 = sphi 0, %s24
    %s46 = sphi 0, %s48
    %s49 = sphi 0, %s46
    %s50 = sphi 0, %s49
    %s66 = sphi 0, %s50
    %s72 = sphi 0, %s74
    %s75 = sphi 0, %s72
    %s76 = sphi 0, %s75
    %s92 = sphi 0, %s76
    %s98 = sphi 0, %s100
    %s101 = sphi 0, %s98
    %s102 = sphi 0, %s101
    %s118 = sphi 0, %s102
    %s124 = sphi 0, %s126
    %s127 = sphi 0, %s124
    %s128 = sphi 0, %s127
    %s144 = sphi 0, %s128
  $region4: #{spectral_conv2d.1} parent=0 // loop_header_branch
    %13 = sbr.rel (%p11) target = $region8
  $region5: #{spectral_conv2d.1} parent=0 // loop_body
    %s15 = ssub.s32 %s10, 1
    %s16 = ssub.s32 %s10, 2
    %s17 = sadd.s32 %s10, 1
    %s18 = ssub.s32 %s10, %s17
    %p19 = scmp.eq.s32.totalorder %s18, 0
    %s21 = sadd.s32 %s20, 1
    %s22 = scalar_select %p19, %s20, %s21
    %p25 = pneg %p19
    %p26 = scmp.eq.s32.totalorder %s10, 1
    %p27 = por %p25, %p26
    %p28 = scmp.ne.s32.totalorder %s20, %s23
    %p29 = scmp.eq.s32.totalorder %s10, 0
    %p30 = por %p28, %p29
    %p31 = scmp.ne.s32.totalorder %s20, %s23
    %p32 = scmp.eq.s32.totalorder %s15, 1
    %p33 = por %p31, %p32
    %p34 = scmp.ne.s32.totalorder %s23, %s24
    %p35 = scmp.eq.s32.totalorder %s15, 0
    %p36 = por %p34, %p35
    %p37 = scmp.ne.s32.totalorder %s23, %s24
    %p38 = scmp.eq.s32.totalorder %s16, 1
    %p39 = por %p37, %p38
    %p41 = scmp.ne.s32.totalorder %s24, %s40
    %p42 = scmp.eq.s32.totalorder %s16, 0
    %p43 = por %p41, %p42
    %s44 = ssub.s32 %s10, %s17
    %p45 = scmp.eq.s32.totalorder %s44, 0
    %s47 = sadd.s32 %s46, 1
    %s48 = scalar_select %p45, %s46, %s47
    %p51 = pneg %p45
    %p52 = scmp.eq.s32.totalorder %s10, 1
    %p53 = por %p51, %p52
    %p54 = scmp.ne.s32.totalorder %s46, %s49
    %p55 = scmp.eq.s32.totalorder %s10, 0
    %p56 = por %p54, %p55
    %p57 = scmp.ne.s32.totalorder %s46, %s49
    %p58 = scmp.eq.s32.totalorder %s15, 1
    %p59 = por %p57, %p58
    %p60 = scmp.ne.s32.totalorder %s49, %s50
    %p61 = scmp.eq.s32.totalorder %s15, 0
    %p62 = por %p60, %p61
    %p63 = scmp.ne.s32.totalorder %s49, %s50
    %p64 = scmp.eq.s32.totalorder %s16, 1
    %p65 = por %p63, %p64
    %p67 = scmp.ne.s32.totalorder %s50, %s66
    %p68 = scmp.eq.s32.totalorder %s16, 0
    %p69 = por %p67, %p68
    %s70 = ssub.s32 %s10, %s17
    %p71 = scmp.eq.s32.totalorder %s70, 0
    %s73 = sadd.s32 %s72, 1
    %s74 = scalar_select %p71, %s72, %s73
    %p77 = pneg %p71
    %p78 = scmp.eq.s32.totalorder %s10, 1
    %p79 = por %p77, %p78
    %p80 = scmp.ne.s32.totalorder %s72, %s75
    %p81 = scmp.eq.s32.totalorder %s10, 0
    %p82 = por %p80, %p81
    %p83 = scmp.ne.s32.totalorder %s72, %s75
    %p84 = scmp.eq.s32.totalorder %s15, 1
    %p85 = por %p83, %p84
    %p86 = scmp.ne.s32.totalorder %s75, %s76
    %p87 = scmp.eq.s32.totalorder %s15, 0
    %p88 = por %p86, %p87
    %p89 = scmp.ne.s32.totalorder %s75, %s76
    %p90 = scmp.eq.s32.totalorder %s16, 1
    %p91 = por %p89, %p90
    %p93 = scmp.ne.s32.totalorder %s76, %s92
    %p94 = scmp.eq.s32.totalorder %s16, 0
    %p95 = por %p93, %p94
    %s96 = ssub.s32 %s10, %s17
    %p97 = scmp.eq.s32.totalorder %s96, 0
    %s99 = sadd.s32 %s98, 1
    %s100 = scalar_select %p97, %s98, %s99
    %p103 = pneg %p97
    %p104 = scmp.eq.s32.totalorder %s10, 1
    %p105 = por %p103, %p104
    %p106 = scmp.ne.s32.totalorder %s98, %s101
    %p107 = scmp.eq.s32.totalorder %s10, 0
    %p108 = por %p106, %p107
    %p109 = scmp.ne.s32.totalorder %s98, %s101
    %p110 = scmp.eq.s32.totalorder %s15, 1
    %p111 = por %p109, %p110
    %p112 = scmp.ne.s32.totalorder %s101, %s102
    %p113 = scmp.eq.s32.totalorder %s15, 0
    %p114 = por %p112, %p113
    %p115 = scmp.ne.s32.totalorder %s101, %s102
    %p116 = scmp.eq.s32.totalorder %s16, 1
    %p117 = por %p115, %p116
    %p119 = scmp.ne.s32.totalorder %s102, %s118
    %p120 = scmp.eq.s32.totalorder %s16, 0
    %p121 = por %p119, %p120
    %s122 = ssub.s32 %s10, %s17
    %p123 = scmp.eq.s32.totalorder %s122, 0
    %s125 = sadd.s32 %s124, 1
    %s126 = scalar_select %p123, %s124, %s125
    %p129 = pneg %p123
    %p130 = scmp.eq.s32.totalorder %s10, 1
    %p131 = por %p129, %p130
    %p132 = scmp.ne.s32.totalorder %s124, %s127
    %p133 = scmp.eq.s32.totalorder %s10, 0
    %p134 = por %p132, %p133
    %p135 = scmp.ne.s32.totalorder %s124, %s127
    %p136 = scmp.eq.s32.totalorder %s15, 1
    %p137 = por %p135, %p136
    %p138 = scmp.ne.s32.totalorder %s127, %s128
    %p139 = scmp.eq.s32.totalorder %s15, 0
    %p140 = por %p138, %p139
    %p141 = scmp.ne.s32.totalorder %s127, %s128
    %p142 = scmp.eq.s32.totalorder %s16, 1
    %p143 = por %p141, %p142
    %p145 = scmp.ne.s32.totalorder %s128, %s144
    %p146 = scmp.eq.s32.totalorder %s16, 0
    %p147 = por %p145, %p146
    %p148 = scmp.le.s32.totalorder 1, %s10
    %p149 = scmp.lt.s32.totalorder %s10, 3
    %p150 = pnand %p148, %p149
    %p151 = pneg %p150
    // Predicated region
    $region9: #{spectral_conv2d.1} parent=5 // pred_check
      _
    $region10: #{spectral_conv2d.1} parent=5 // pred_check_branch
      %153 = sbr.rel (%p150) target = $region12
    $region11: #{spectral_conv2d.1} parent=5 // pred_region
      %s154 = ssub.s32 %s10, 1
    $region12: #{spectral_conv2d.1} parent=5 // pred_fallthru
      _
    %p155 = scmp.lt.s32.totalorder %s10, 2
    // Predicated region
    $region13: #{spectral_conv2d.1} parent=5 // pred_check
      %p156 = pneg %p155
    $region14: #{spectral_conv2d.1} parent=5 // pred_check_branch
      %158 = sbr.rel (%p156) target = $region16
    $region15: #{spectral_conv2d.1} parent=5 // pred_region
      // Predicated region
      $region17: #{spectral_conv2d.1} parent=15 // pred_check
        %p159 = pneg %p30
      $region18: #{spectral_conv2d.1} parent=15 // pred_check_branch
        %161 = sbr.rel (%p159) target = $region20
      $region19: #{spectral_conv2d.1} parent=15 // pred_region
        %p162 = scmp.lt.s32.totalorder %s10, 1
        %s163 = scalar_select %p162, %s10, 1
        %s164 = smul.addr %s163, 2
        %s165 = smul.addr %s164, 4
        %s166 = scalar_lea.vmem %s0, %s165
      $region20: #{spectral_conv2d.1} parent=15 // pred_fallthru
        _
      // Predicated region
      $region21: #{spectral_conv2d.1} parent=15 // pred_check
        %p167 = pneg %p56
      $region22: #{spectral_conv2d.1} parent=15 // pred_check_branch
        %169 = sbr.rel (%p167) target = $region24
      $region23: #{spectral_conv2d.1} parent=15 // pred_region
        %p170 = scmp.lt.s32.totalorder %s10, 1
        %s171 = scalar_select %p170, %s10, 1
        %s172 = smul.addr %s171, 2
        %s173 = smul.addr %s172, 4
        %s174 = scalar_lea.vmem %s1, %s173
      $region24: #{spectral_conv2d.1} parent=15 // pred_fallthru
        _
      // Predicated region
      $region25: #{spectral_conv2d.1} parent=15 // pred_check
        %p175 = pneg %p82
      $region26: #{spectral_conv2d.1} parent=15 // pred_check_branch
        %177 = sbr.rel (%p175) target = $region28
      $region27: #{spectral_conv2d.1} parent=15 // pred_region
        %p178 = scmp.lt.s32.totalorder %s10, 1
        %s179 = scalar_select %p178, %s10, 1
        %s180 = smul.addr %s179, 4
        %s181 = smul.addr %s180, 4
        %s182 = scalar_lea.vmem %s2, %s181
      $region28: #{spectral_conv2d.1} parent=15 // pred_fallthru
        _
      // Predicated region
      $region29: #{spectral_conv2d.1} parent=15 // pred_check
        %p183 = pneg %p108
      $region30: #{spectral_conv2d.1} parent=15 // pred_check_branch
        %185 = sbr.rel (%p183) target = $region32
      $region31: #{spectral_conv2d.1} parent=15 // pred_region
        %p186 = scmp.lt.s32.totalorder %s10, 1
        %s187 = scalar_select %p186, %s10, 1
        %s188 = smul.addr %s187, 4
        %s189 = smul.addr %s188, 4
        %s190 = scalar_lea.vmem %s3, %s189
      $region32: #{spectral_conv2d.1} parent=15 // pred_fallthru
        _
    $region16: #{spectral_conv2d.1} parent=5 // pred_fallthru
      _
    %p191 = scmp.le.s32.totalorder 1, %s10
    %p192 = scmp.lt.s32.totalorder %s10, 3
    %p193 = pnand %p191, %p192
    %p194 = pneg %p193
    // Predicated region
    $region33: #{spectral_conv2d.1} parent=5 // pred_check
      _
    $region34: #{spectral_conv2d.1} parent=5 // pred_check_branch
      %196 = sbr.rel (%p193) target = $region36
    $region35: #{spectral_conv2d.1} parent=5 // pred_region
      %s197 = ssub.s32 %s10, 1
      %p198 = scmp.lt.s32.totalorder %s15, 1
      %s199 = scalar_select %p198, %s15, 1
      %s200 = smul.addr %s199, 2
      %s201 = smul.addr %s200, 4
      %s202 = scalar_lea.vmem %s0, %s201
      %p203 = pneg %p36
      %p204 = pneg %p33
      %p205 = scmp.lt.s32.totalorder %s15, 1
      %s206 = scalar_select %p205, %s15, 1
      %s207 = smul.addr %s206, 2
      %s208 = smul.addr %s207, 4
      %s209 = scalar_lea.vmem %s1, %s208
      %p210 = pneg %p62
      %p211 = pneg %p59
      %p212 = scmp.lt.s32.totalorder %s15, 1
      %s213 = scalar_select %p212, %s15, 1
      %s214 = smul.addr %s213, 4
      %s215 = smul.addr %s214, 4
      %s216 = scalar_lea.vmem %s2, %s215
      %p217 = pneg %p88
      %p218 = pneg %p85
      %p219 = scmp.lt.s32.totalorder %s15, 1
      %s220 = scalar_select %p219, %s15, 1
      %s221 = smul.addr %s220, 4
      %s222 = smul.addr %s221, 4
      %s223 = scalar_lea.vmem %s3, %s222
      %p224 = pneg %p114
      %p225 = pneg %p111
      %p226 = pneg %p140
      %p227 = pneg %p137
      %p228 = scmp.lt.s32.totalorder %s15, 1
      %s229 = scalar_select %p228, %s15, 1
      %s230 = smul.addr %s229, 4
      %s231 = smul.addr %s230, 4
      %s232 = scalar_lea.vmem %s4, %s231
      %p233 = scmp.lt.s32.totalorder %s15, 1
      %s234 = scalar_select %p233, %s15, 1
      %s235 = smul.addr %s234, 2
      %s236 = smul.addr %s235, 4
      %s237 = scalar_lea.vmem %s0, %s236
      %p238 = scmp.lt.s32.totalorder %s15, 1
      %s239 = scalar_select %p238, %s15, 1
      %s240 = smul.addr %s239, 2
      %s241 = smul.addr %s240, 4
      %s242 = scalar_lea.vmem %s1, %s241
      %p243 = scmp.lt.s32.totalorder %s15, 1
      %s244 = scalar_select %p243, %s15, 1
      %s245 = smul.addr %s244, 4
      %s246 = smul.addr %s245, 4
      %s247 = scalar_lea.vmem %s2, %s246
      %p248 = scmp.lt.s32.totalorder %s15, 1
      %s249 = scalar_select %p248, %s15, 1
      %s250 = smul.addr %s249, 4
      %s251 = smul.addr %s250, 4
      %s252 = scalar_lea.vmem %s3, %s251
      %p253 = scmp.lt.s32.totalorder %s15, 1
      %s254 = scalar_select %p253, %s15, 1
      %s255 = smul.addr %s254, 4
      %s256 = smul.addr %s255, 4
      %s257 = scalar_lea.vmem %s4, %s256
      %v258 = vld [vmem:[%s237] sm:$0xf]
      %v259 = vld [vmem:[%s237 + $0x4] sm:$0xf]
      %v260 = vld [vmem:[%s242] sm:$0xf]
      %v261 = vld [vmem:[%s242 + $0x4] sm:$0xf]
      %v262 = vld [vmem:[%s247] sm:$0xf]
      %v263 = vld [vmem:[%s247 + $0x4] sm:$0xf]
      %v264 = vld [vmem:[%s247 + $0x8] sm:$0xf]
      %v265 = vld [vmem:[%s247 + $0xc] sm:$0xf]
      %v266 = vld [vmem:[%s252] sm:$0xf]
      %v267 = vld [vmem:[%s252 + $0x4] sm:$0xf]
      %v268 = vld [vmem:[%s252 + $0x8] sm:$0xf]
      %v269 = vld [vmem:[%s252 + $0xc] sm:$0xf]
      %v270 = vlaneseq
      %v271 = vshrl.u32 %v270, 7
      %v272 = vsub.s32 0, %v271
      %v273 = vrot.slane %v258, %v272
      %v274 = vlaneseq
      %v275 = vshrl.u32 %v274, 7
      %v276 = vsub.s32 0, %v275
      %v277 = vrot.slane %v259, %v276
      %v278 = vmul.f32 %v273, %v262
      %v279 = vmul.f32 %v277, %v262
      %v280 = vlaneseq
      %v281 = vshrl.u32 %v280, 7
      %v282 = vsub.s32 0, %v281
      %v283 = vrot.slane %v260, %v282
      %v284 = vlaneseq
      %v285 = vshrl.u32 %v284, 7
      %v286 = vsub.s32 0, %v285
      %v287 = vrot.slane %v261, %v286
      %v288 = vmul.f32 %v283, %v266
      %v289 = vmul.f32 %v287, %v266
      %v290 = vsub.f32 %v278, %v288
      %v291 = vsub.f32 %v279, %v289
      %v292 = vadd.f32 %v290, 0.0
      %v293 = vadd.f32 %v291, 0.0
      %v294 = vmul.f32 %v273, %v266
      %v295 = vmul.f32 %v277, %v266
      %v296 = vmul.f32 %v283, %v262
      %v297 = vmul.f32 %v287, %v262
      %v298 = vadd.f32 %v294, %v296
      %v299 = vadd.f32 %v295, %v297
      %v300 = vadd.f32 %v298, 0.0
      %v301 = vadd.f32 %v299, 0.0
      %v302 = vlaneseq
      %v303 = vshrl.u32 %v302, 7
      %v304 = vsub.s32 1, %v303
      %v305 = vrot.slane %v258, %v304
      %v306 = vlaneseq
      %v307 = vshrl.u32 %v306, 7
      %v308 = vsub.s32 1, %v307
      %v309 = vrot.slane %v259, %v308
      %v310 = vmul.f32 %v305, %v263
      %v311 = vmul.f32 %v309, %v263
      %v312 = vlaneseq
      %v313 = vshrl.u32 %v312, 7
      %v314 = vsub.s32 1, %v313
      %v315 = vrot.slane %v260, %v314
      %v316 = vlaneseq
      %v317 = vshrl.u32 %v316, 7
      %v318 = vsub.s32 1, %v317
      %v319 = vrot.slane %v261, %v318
      %v320 = vmul.f32 %v315, %v267
      %v321 = vmul.f32 %v319, %v267
      %v322 = vsub.f32 %v310, %v320
      %v323 = vsub.f32 %v311, %v321
      %v324 = vadd.f32 %v292, %v322
      %v325 = vadd.f32 %v293, %v323
      %v326 = vmul.f32 %v305, %v267
      %v327 = vmul.f32 %v309, %v267
      %v328 = vmul.f32 %v315, %v263
      %v329 = vmul.f32 %v319, %v263
      %v330 = vadd.f32 %v326, %v328
      %v331 = vadd.f32 %v327, %v329
      %v332 = vadd.f32 %v300, %v330
      %v333 = vadd.f32 %v301, %v331
      %v334 = vlaneseq
      %v335 = vshrl.u32 %v334, 7
      %v336 = vsub.s32 2, %v335
      %v337 = vrot.slane %v258, %v336
      %v338 = vlaneseq
      %v339 = vshrl.u32 %v338, 7
      %v340 = vsub.s32 2, %v339
      %v341 = vrot.slane %v259, %v340
      %v342 = vmul.f32 %v337, %v264
      %v343 = vmul.f32 %v341, %v264
      %v344 = vlaneseq
      %v345 = vshrl.u32 %v344, 7
      %v346 = vsub.s32 2, %v345
      %v347 = vrot.slane %v260, %v346
      %v348 = vlaneseq
      %v349 = vshrl.u32 %v348, 7
      %v350 = vsub.s32 2, %v349
      %v351 = vrot.slane %v261, %v350
      %v352 = vmul.f32 %v347, %v268
      %v353 = vmul.f32 %v351, %v268
      %v354 = vsub.f32 %v342, %v352
      %v355 = vsub.f32 %v343, %v353
      %v356 = vadd.f32 %v324, %v354
      %v357 = vadd.f32 %v325, %v355
      %v358 = vmul.f32 %v337, %v268
      %v359 = vmul.f32 %v341, %v268
      %v360 = vmul.f32 %v347, %v264
      %v361 = vmul.f32 %v351, %v264
      %v362 = vadd.f32 %v358, %v360
      %v363 = vadd.f32 %v359, %v361
      %v364 = vadd.f32 %v332, %v362
      %v365 = vadd.f32 %v333, %v363
      %v366 = vlaneseq
      %v367 = vshrl.u32 %v366, 7
      %v368 = vsub.s32 3, %v367
      %v369 = vrot.slane %v258, %v368
      %v370 = vlaneseq
      %v371 = vshrl.u32 %v370, 7
      %v372 = vsub.s32 3, %v371
      %v373 = vrot.slane %v259, %v372
      %v374 = vmul.f32 %v369, %v265
      %v375 = vmul.f32 %v373, %v265
      %v376 = vlaneseq
      %v377 = vshrl.u32 %v376, 7
      %v378 = vsub.s32 3, %v377
      %v379 = vrot.slane %v260, %v378
      %v380 = vlaneseq
      %v381 = vshrl.u32 %v380, 7
      %v382 = vsub.s32 3, %v381
      %v383 = vrot.slane %v261, %v382
      %v384 = vmul.f32 %v379, %v269
      %v385 = vmul.f32 %v383, %v269
      %v386 = vsub.f32 %v374, %v384
      %v387 = vsub.f32 %v375, %v385
      %v388 = vadd.f32 %v356, %v386
      %v389 = vadd.f32 %v357, %v387
      %v390 = vmul.f32 %v369, %v269
      %v391 = vmul.f32 %v373, %v269
      %v392 = vmul.f32 %v379, %v265
      %v393 = vmul.f32 %v383, %v265
      %v394 = vadd.f32 %v390, %v392
      %v395 = vadd.f32 %v391, %v393
      %v396 = vadd.f32 %v364, %v394
      %v397 = vadd.f32 %v365, %v395
      %vm398 = vcmask 125952
      %399 = vst.msk [vmem:[%s257] sm:$0xf] %vm398, %v388
      %400 = vst.msk [vmem:[%s257 + $0x4] sm:$0xf] %vm398, %v389
      %s401 = scalar_lea.vmem %s257, 8
      %402 = vst.msk [vmem:[%s401] sm:$0xf] %vm398, %v396
      %403 = vst.msk [vmem:[%s401 + $0x4] sm:$0xf] %vm398, %v397
      %p404 = scmp.lt.s32.totalorder %s15, 1
      %s405 = scalar_select %p404, %s15, 1
      %s406 = smul.addr %s405, 4
      %s407 = smul.addr %s406, 4
      %s408 = scalar_lea.vmem %s4, %s407
      // Predicated region
      $region37: #{spectral_conv2d.1} parent=35 // pred_check
        %p409 = pneg %p137
      $region38: #{spectral_conv2d.1} parent=35 // pred_check_branch
        %411 = sbr.rel (%p409) target = $region40
      $region39: #{spectral_conv2d.1} parent=35 // pred_region
        _
      $region40: #{spectral_conv2d.1} parent=35 // pred_fallthru
        _
    $region36: #{spectral_conv2d.1} parent=5 // pred_fallthru
      _
    %p412 = scmp.le.s32.totalorder 2, %s10
    // Predicated region
    $region41: #{spectral_conv2d.1} parent=5 // pred_check
      %p413 = pneg %p412
    $region42: #{spectral_conv2d.1} parent=5 // pred_check_branch
      %415 = sbr.rel (%p413) target = $region44
    $region43: #{spectral_conv2d.1} parent=5 // pred_region
      %s416 = ssub.s32 %s10, 2
      // Predicated region
      $region45: #{spectral_conv2d.1} parent=43 // pred_check
        %p417 = pneg %p143
      $region46: #{spectral_conv2d.1} parent=43 // pred_check_branch
        %419 = sbr.rel (%p417) target = $region48
      $region47: #{spectral_conv2d.1} parent=43 // pred_region
        %p420 = scmp.lt.s32.totalorder %s16, 1
        %s421 = scalar_select %p420, %s16, 1
        %s422 = smul.addr %s421, 4
        %s423 = smul.addr %s422, 4
        %s424 = scalar_lea.vmem %s4, %s423
      $region48: #{spectral_conv2d.1} parent=43 // pred_fallthru
        _
    $region44: #{spectral_conv2d.1} parent=5 // pred_fallthru
      _
  $region6: #{spectral_conv2d.1} parent=0 // loop_footer
    %s14 = sadd.s32 1, %s10
  $region7: #{spectral_conv2d.1} parent=0 // loop_footer_branch
    %9 = sbr.rel target = $region3
  $region8: #{spectral_conv2d.1} parent=0 // loop_exit
    _

// kernel: reverse.0
$region0: #{reverse.0}
  %s0 = inlined_call_operand.vmem [shape: f32[2,4,16,7], index: 0, kind: input, shape index: {}]
  %s1 = inlined_call_operand.vmem [shape: f32[2,4,16,7], index: 1, kind: output, shape index: {}]
  $region1: #{reverse.0} parent=0
    #allocation0 [shape = 'u8[65536]{0}', space=vmem, size = 0x10000, scoped, tag = 'operand span for operand 0']
    #allocation1 [shape = 'u8[32768]{0}', space=vmem, size = 0x8000, scoped, tag = 'operand span for operand 1']
    %s2 = scalar_lea.vmem [#allocation0], 8
    // Predicated region
    $region2: #{reverse.0} parent=1 // pred_check
      _
    $region3: #{reverse.0} parent=1 // pred_check_branch
      %4 = sbr.rel (0) target = $region5
    $region4: #{reverse.0} parent=1 // pred_region
      // Predicated region
      $region6: #{reverse.0} parent=4 // pred_check
        _
      $region7: #{reverse.0} parent=4 // pred_check_branch
        %6 = sbr.rel (0) target = $region9
      $region8: #{reverse.0} parent=4 // pred_region
        // Predicated region
        $region21: #{reverse.0} parent=8 // pred_check
          _
        $region22: #{reverse.0} parent=8 // pred_check_branch
          %36 = sbr.rel (0) target = $region24
        $region23: #{reverse.0} parent=8 // pred_region
          loop: start=0, step=1, limit=1
          $region25: #{reverse.0} parent=23 // loop_pre_header
            _
          $region26: #{reverse.0} parent=23 // loop_header
            %s38 = sphi 0, %s42
            %p39 = scmp.ge.s32.totalorder %s38, 1
            %s43 = sphi %s0, %s0
            %s44 = sphi %s2, %s2
          $region27: #{reverse.0} parent=23 // loop_header_branch
            %41 = sbr.rel (%p39) target = $region31
          $region28: #{reverse.0} parent=23 // loop_body
            %v45 = vld [vmem:[%s43] sm:$0xff]
            %46 = vst [vmem:[%s44] sm:$0xff] %v45
            %v47 = vld [vmem:[%s43 + $0x8] sm:$0xff]
            %48 = vst [vmem:[%s44 + $0x10] sm:$0xff] %v47
            %v49 = vld [vmem:[%s43 + $0x10] sm:$0xff]
            %50 = vst [vmem:[%s44 + $0x20] sm:$0xff] %v49
            %v51 = vld [vmem:[%s43 + $0x18] sm:$0xff]
            %52 = vst [vmem:[%s44 + $0x30] sm:$0xff] %v51
            %v53 = vld [vmem:[%s43 + $0x20] sm:$0xff]
            %54 = vst [vmem:[%s44 + $0x40] sm:$0xff] %v53
            %v55 = vld [vmem:[%s43 + $0x28] sm:$0xff]
            %56 = vst [vmem:[%s44 + $0x50] sm:$0xff] %v55
            %v57 = vld [vmem:[%s43 + $0x30] sm:$0xff]
            %58 = vst [vmem:[%s44 + $0x60] sm:$0xff] %v57
            %v59 = vld [vmem:[%s43 + $0x38] sm:$0xff]
            %60 = vst [vmem:[%s44 + $0x70] sm:$0xff] %v59
          $region29: #{reverse.0} parent=23 // loop_footer
            %s42 = sadd.s32 1, %s38
          $region30: #{reverse.0} parent=23 // loop_footer_branch
            %37 = sbr.rel target = $region26
          $region31: #{reverse.0} parent=23 // loop_exit
            _
        $region24: #{reverse.0} parent=8 // pred_fallthru
          _
        // Predicated region
        $region32: #{reverse.0} parent=8 // pred_check
          _
        $region33: #{reverse.0} parent=8 // pred_check_branch
          %62 = sbr.rel target = $region35
        $region34: #{reverse.0} parent=8 // pred_region
          _
        $region35: #{reverse.0} parent=8 // pred_fallthru
          _
      $region9: #{reverse.0} parent=4 // pred_fallthru
        _
      // Predicated region
      $region10: #{reverse.0} parent=4 // pred_check
        _
      $region11: #{reverse.0} parent=4 // pred_check_branch
        %8 = sbr.rel target = $region13
      $region12: #{reverse.0} parent=4 // pred_region
        %s10 = ssub.s32 256, 1
        loop: start=0, step=1, limit=1
        $region14: #{reverse.0} parent=12 // loop_pre_header
          _
        $region15: #{reverse.0} parent=12 // loop_header
          %s12 = sphi 0, %s16
          %p13 = scmp.ge.s32.totalorder %s12, 1
          %s17 = sphi %s0, %s0
          %s18 = sphi %s2, %s2
        $region16: #{reverse.0} parent=12 // loop_header_branch
          %15 = sbr.rel (%p13) target = $region20
        $region17: #{reverse.0} parent=12 // loop_body
          %v19 = vld [vmem:[%s17] sm:%s10]
          %20 = vst [vmem:[%s18] sm:%s10] %v19
          %v21 = vld [vmem:[%s17 + $0x8] sm:%s10]
          %22 = vst [vmem:[%s18 + $0x10] sm:%s10] %v21
          %v23 = vld [vmem:[%s17 + $0x10] sm:%s10]
          %24 = vst [vmem:[%s18 + $0x20] sm:%s10] %v23
          %v25 = vld [vmem:[%s17 + $0x18] sm:%s10]
          %26 = vst [vmem:[%s18 + $0x30] sm:%s10] %v25
          %v27 = vld [vmem:[%s17 + $0x20] sm:%s10]
          %28 = vst [vmem:[%s18 + $0x40] sm:%s10] %v27
          %v29 = vld [vmem:[%s17 + $0x28] sm:%s10]
          %30 = vst [vmem:[%s18 + $0x50] sm:%s10] %v29
          %v31 = vld [vmem:[%s17 + $0x30] sm:%s10]
          %32 = vst [vmem:[%s18 + $0x60] sm:%s10] %v31
          %v33 = vld [vmem:[%s17 + $0x38] sm:%s10]
          %34 = vst [vmem:[%s18 + $0x70] sm:%s10] %v33
        $region18: #{reverse.0} parent=12 // loop_footer
          %s16 = sadd.s32 1, %s12
        $region19: #{reverse.0} parent=12 // loop_footer_branch
          %11 = sbr.rel target = $region15
        $region20: #{reverse.0} parent=12 // loop_exit
          _
      $region13: #{reverse.0} parent=4 // pred_fallthru
        _
    $region5: #{reverse.0} parent=1 // pred_fallthru
      _
    %63 = vnop
    %s64 = scalar_lea.vmem [#allocation0], 7
    %v65 = vld [vmem:[%s64] ss:$-1 sm:$0xff]
    %v66 = vrot.slane %v65, 1
    %67 = vst [vmem:[#allocation1] sm:$0xff] %v66
    %s68 = scalar_lea.vmem [#allocation0], 8
    %s69 = scalar_lea.vmem %s68, 7 [#allocation0]
    %v70 = vld [vmem:[%s69] ss:$-1 sm:$0xff]
    %v71 = vrot.slane %v70, 1
    %v72 = vlaneseq
    %v73 = vshrl.u32 %v72, 7
    %vm74 = vcmp.lt.s32.totalorder %v73, 7
    %75 = vst.msk [vmem:[#allocation1] sm:$0xff] %vm74, %v71
    %s76 = scalar_lea.vmem [#allocation1], 8
    %s77 = scalar_lea.vmem [#allocation0], 16
    %s78 = scalar_lea.vmem %s77, 7 [#allocation0]
    %v79 = vld [vmem:[%s78] ss:$-1 sm:$0xff]
    %v80 = vrot.slane %v79, 1
    %81 = vst [vmem:[%s76] sm:$0xff] %v80
    %s82 = scalar_lea.vmem %s77, 8 [#allocation0]
    %s83 = scalar_lea.vmem %s82, 7 [#allocation0]
    %v84 = vld [vmem:[%s83] ss:$-1 sm:$0xff]
    %v85 = vrot.slane %v84, 1
    %v86 = vlaneseq
    %v87 = vshrl.u32 %v86, 7
    %vm88 = vcmp.lt.s32.totalorder %v87, 7
    %89 = vst.msk [vmem:[%s76] sm:$0xff] %vm88, %v85
    %s90 = scalar_lea.vmem [#allocation1], 16
    %s91 = scalar_lea.vmem [#allocation0], 32
    %s92 = scalar_lea.vmem %s91, 7 [#allocation0]
    %v93 = vld [vmem:[%s92] ss:$-1 sm:$0xff]
    %v94 = vrot.slane %v93, 1
    %95 = vst [vmem:[%s90] sm:$0xff] %v94
    %s96 = scalar_lea.vmem %s91, 8 [#allocation0]
    %s97 = scalar_lea.vmem %s96, 7 [#allocation0]
    %v98 = vld [vmem:[%s97] ss:$-1 sm:$0xff]
    %v99 = vrot.slane %v98, 1
    %v100 = vlaneseq
    %v101 = vshrl.u32 %v100, 7
    %vm102 = vcmp.lt.s32.totalorder %v101, 7
    %103 = vst.msk [vmem:[%s90] sm:$0xff] %vm102, %v99
    %s104 = scalar_lea.vmem [#allocation1], 24
    %s105 = scalar_lea.vmem [#allocation0], 48
    %s106 = scalar_lea.vmem %s105, 7 [#allocation0]
    %v107 = vld [vmem:[%s106] ss:$-1 sm:$0xff]
    %v108 = vrot.slane %v107, 1
    %109 = vst [vmem:[%s104] sm:$0xff] %v108
    %s110 = scalar_lea.vmem %s105, 8 [#allocation0]
    %s111 = scalar_lea.vmem %s110, 7 [#allocation0]
    %v112 = vld [vmem:[%s111] ss:$-1 sm:$0xff]
    %v113 = vrot.slane %v112, 1
    %v114 = vlaneseq
    %v115 = vshrl.u32 %v114, 7
    %vm116 = vcmp.lt.s32.totalorder %v115, 7
    %117 = vst.msk [vmem:[%s104] sm:$0xff] %vm116, %v113
    %s118 = scalar_lea.vmem [#allocation1], 32
    %s119 = scalar_lea.vmem [#allocation0], 64
    %s120 = scalar_lea.vmem %s119, 7 [#allocation0]
    %v121 = vld [vmem:[%s120] ss:$-1 sm:$0xff]
    %v122 = vrot.slane %v121, 1
    %123 = vst [vmem:[%s118] sm:$0xff] %v122
    %s124 = scalar_lea.vmem %s119, 8 [#allocation0]
    %s125 = scalar_lea.vmem %s124, 7 [#allocation0]
    %v126 = vld [vmem:[%s125] ss:$-1 sm:$0xff]
    %v127 = vrot.slane %v126, 1
    %v128 = vlaneseq
    %v129 = vshrl.u32 %v128, 7
    %vm130 = vcmp.lt.s32.totalorder %v129, 7
    %131 = vst.msk [vmem:[%s118] sm:$0xff] %vm130, %v127
    %s132 = scalar_lea.vmem [#allocation1], 40
    %s133 = scalar_lea.vmem [#allocation0], 80
    %s134 = scalar_lea.vmem %s133, 7 [#allocation0]
    %v135 = vld [vmem:[%s134] ss:$-1 sm:$0xff]
    %v136 = vrot.slane %v135, 1
    %137 = vst [vmem:[%s132] sm:$0xff] %v136
    %s138 = scalar_lea.vmem %s133, 8 [#allocation0]
    %s139 = scalar_lea.vmem %s138, 7 [#allocation0]
    %v140 = vld [vmem:[%s139] ss:$-1 sm:$0xff]
    %v141 = vrot.slane %v140, 1
    %v142 = vlaneseq
    %v143 = vshrl.u32 %v142, 7
    %vm144 = vcmp.lt.s32.totalorder %v143, 7
    %145 = vst.msk [vmem:[%s132] sm:$0xff] %vm144, %v141
    %s146 = scalar_lea.vmem [#allocation1], 48
    %s147 = scalar_lea.vmem [#allocation0], 96
    %s148 = scalar_lea.vmem %s147, 7 [#allocation0]
    %v149 = vld [vmem:[%s148] ss:$-1 sm:$0xff]
    %v150 = vrot.slane %v149, 1
    %151 = vst [vmem:[%s146] sm:$0xff] %v150
    %s152 = scalar_lea.vmem %s147, 8 [#allocation0]
    %s153 = scalar_lea.vmem %s152, 7 [#allocation0]
    %v154 = vld [vmem:[%s153] ss:$-1 sm:$0xff]
    %v155 = vrot.slane %v154, 1
    %v156 = vlaneseq
    %v157 = vshrl.u32 %v156, 7
    %vm158 = vcmp.lt.s32.totalorder %v157, 7
    %159 = vst.msk [vmem:[%s146] sm:$0xff] %vm158, %v155
    %s160 = scalar_lea.vmem [#allocation1], 56
    %s161 = scalar_lea.vmem [#allocation0], 112
    %s162 = scalar_lea.vmem %s161, 7 [#allocation0]
    %v163 = vld [vmem:[%s162] ss:$-1 sm:$0xff]
    %v164 = vrot.slane %v163, 1
    %165 = vst [vmem:[%s160] sm:$0xff] %v164
    %s166 = scalar_lea.vmem %s161, 8 [#allocation0]
    %s167 = scalar_lea.vmem %s166, 7 [#allocation0]
    %v168 = vld [vmem:[%s167] ss:$-1 sm:$0xff]
    %v169 = vrot.slane %v168, 1
    %v170 = vlaneseq
    %v171 = vshrl.u32 %v170, 7
    %vm172 = vcmp.lt.s32.totalorder %v171, 7
    %173 = vst.msk [vmem:[%s160] sm:$0xff] %vm172, %v169
    // Predicated region
    $region36: #{reverse.0} parent=1 // pred_check
      _
    $region37: #{reverse.0} parent=1 // pred_check_branch
      %175 = sbr.rel (0) target = $region39
    $region38: #{reverse.0} parent=1 // pred_region
      // Predicated region
      $region40: #{reverse.0} parent=38 // pred_check
        _
      $region41: #{reverse.0} parent=38 // pred_check_branch
        %177 = sbr.rel (0) target = $region43
      $region42: #{reverse.0} parent=38 // pred_region
        // Predicated region
        $region55: #{reverse.0} parent=42 // pred_check
          _
        $region56: #{reverse.0} parent=42 // pred_check_branch
          %207 = sbr.rel (0) target = $region58
        $region57: #{reverse.0} parent=42 // pred_region
          loop: start=0, step=1, limit=1
          $region59: #{reverse.0} parent=57 // loop_pre_header
            _
          $region60: #{reverse.0} parent=57 // loop_header
            %s209 = sphi 0, %s213
            %p210 = scmp.ge.s32.totalorder %s209, 1
            %s214 = sphi [#allocation1], [#allocation1]
            %s215 = sphi %s1, %s1
          $region61: #{reverse.0} parent=57 // loop_header_branch
            %212 = sbr.rel (%p210) target = $region65
          $region62: #{reverse.0} parent=57 // loop_body
            %v216 = vld [vmem:[%s214] sm:$0xff]
            %217 = vst [vmem:[%s215] sm:$0xff] %v216
            %v218 = vld [vmem:[%s214 + $0x8] sm:$0xff]
            %219 = vst [vmem:[%s215 + $0x8] sm:$0xff] %v218
            %v220 = vld [vmem:[%s214 + $0x10] sm:$0xff]
            %221 = vst [vmem:[%s215 + $0x10] sm:$0xff] %v220
            %v222 = vld [vmem:[%s214 + $0x18] sm:$0xff]
            %223 = vst [vmem:[%s215 + $0x18] sm:$0xff] %v222
            %v224 = vld [vmem:[%s214 + $0x20] sm:$0xff]
            %225 = vst [vmem:[%s215 + $0x20] sm:$0xff] %v224
            %v226 = vld [vmem:[%s214 + $0x28] sm:$0xff]
            %227 = vst [vmem:[%s215 + $0x28] sm:$0xff] %v226
            %v228 = vld [vmem:[%s214 + $0x30] sm:$0xff]
            %229 = vst [vmem:[%s215 + $0x30] sm:$0xff] %v228
            %v230 = vld [vmem:[%s214 + $0x38] sm:$0xff]
            %231 = vst [vmem:[%s215 + $0x38] sm:$0xff] %v230
          $region63: #{reverse.0} parent=57 // loop_footer
            %s213 = sadd.s32 1, %s209
          $region64: #{reverse.0} parent=57 // loop_footer_branch
            %208 = sbr.rel target = $region60
          $region65: #{reverse.0} parent=57 // loop_exit
            _
        $region58: #{reverse.0} parent=42 // pred_fallthru
          _
        // Predicated region
        $region66: #{reverse.0} parent=42 // pred_check
          _
        $region67: #{reverse.0} parent=42 // pred_check_branch
          %233 = sbr.rel target = $region69
        $region68: #{reverse.0} parent=42 // pred_region
          _
        $region69: #{reverse.0} parent=42 // pred_fallthru
          _
      $region43: #{reverse.0} parent=38 // pred_fallthru
        _
      // Predicated region
      $region44: #{reverse.0} parent=38 // pred_check
        _
      $region45: #{reverse.0} parent=38 // pred_check_branch
        %179 = sbr.rel target = $region47
      $region46: #{reverse.0} parent=38 // pred_region
        %s181 = ssub.s32 256, 1
        loop: start=0, step=1, limit=1
        $region48: #{reverse.0} parent=46 // loop_pre_header
          _
        $region49: #{reverse.0} parent=46 // loop_header
          %s183 = sphi 0, %s187
          %p184 = scmp.ge.s32.totalorder %s183, 1
          %s188 = sphi [#allocation1], [#allocation1]
          %s189 = sphi %s1, %s1
        $region50: #{reverse.0} parent=46 // loop_header_branch
          %186 = sbr.rel (%p184) target = $region54
        $region51: #{reverse.0} parent=46 // loop_body
          %v190 = vld [vmem:[%s188] sm:%s181]
          %191 = vst [vmem:[%s189] sm:%s181] %v190
          %v192 = vld [vmem:[%s188 + $0x8] sm:%s181]
          %193 = vst [vmem:[%s189 + $0x8] sm:%s181] %v192
          %v194 = vld [vmem:[%s188 + $0x10] sm:%s181]
          %195 = vst [vmem:[%s189 + $0x10] sm:%s181] %v194
          %v196 = vld [vmem:[%s188 + $0x18] sm:%s181]
          %197 = vst [vmem:[%s189 + $0x18] sm:%s181] %v196
          %v198 = vld [vmem:[%s188 + $0x20] sm:%s181]
          %199 = vst [vmem:[%s189 + $0x20] sm:%s181] %v198
          %v200 = vld [vmem:[%s188 + $0x28] sm:%s181]
          %201 = vst [vmem:[%s189 + $0x28] sm:%s181] %v200
          %v202 = vld [vmem:[%s188 + $0x30] sm:%s181]
          %203 = vst [vmem:[%s189 + $0x30] sm:%s181] %v202
          %v204 = vld [vmem:[%s188 + $0x38] sm:%s181]
          %205 = vst [vmem:[%s189 + $0x38] sm:%s181] %v204
        $region52: #{reverse.0} parent=46 // loop_footer
          %s187 = sadd.s32 1, %s183
        $region53: #{reverse.0} parent=46 // loop_footer_branch
          %182 = sbr.rel target = $region49
        $region54: #{reverse.0} parent=46 // loop_exit
          _
      $region47: #{reverse.0} parent=38 // pred_fallthru
        _
    $region39: #{reverse.0} parent=1 // pred_fallthru
      _
    %234 = vnop

</llo_original>
